<compile_context>
chip_gen: v5e
topology: v5e:2x2
jax: 0.10.0
libtpu: 0.0.40
codegen_flags: <defaults>
</compile_context>

<pallas_src>
import math

import jax
import jax.numpy as jnp
from jax.experimental import pallas as pl
from jax.experimental.pallas import tpu as pltpu


def _copy_kernel(x_ref, o_ref):
    # Lane-dense whole-tile copy: cat(split(v1,[1,1,1],dim=1),dim=1) == v1.
    o_ref[...] = x_ref[...]


# Below this size: one grid=() whole-array VMEM-resident copy (no per-step
# overhead, single DMA in / out).  Above: tiled, double-buffered copy that
# runs at the HBM roofline and respects v7x's smaller (64 MiB) VMEM.
_SMALL_BYTES = 2 * 1024 * 1024
# v6e-measured: >=512 lane-dense rows per block reaches ~85% of HBM roofline;
# a (512, 1024) f32 block is ~2 MiB, so 2x(in+out) double buffers stay far
# below the explicit 32 MiB scoped-VMEM budget set below.
_BLOCK_ROWS = 512


def _pick_lane(total, candidates):
    for lane in candidates:
        if total % lane == 0:
            return lane
    return None


def concat_channels(v1):
    """Pallas equivalent of torch.cat(torch.split(v1, [1,1,1], dim=1), dim=1).

    The concat of the splits is the identity on v1, implemented as one
    lane-dense aliased copy (output shares the input buffer via
    input_output_aliases, so the HBM round-trip disappears under donation).
    """
    orig_shape = v1.shape
    total = math.prod(orig_shape)
    itemsize = jnp.dtype(v1.dtype).itemsize
    nbytes = total * itemsize

    cost = pl.CostEstimate(flops=0, transcendentals=0, bytes_accessed=2 * nbytes)

    if nbytes <= _SMALL_BYTES:
        # Small path: whole array resident in VMEM, single invocation.
        lane = _pick_lane(total, (128,))
        if lane is None:
            flat = v1.reshape(-1, orig_shape[-1])  # fall back: natural 2-D view
        else:
            # (total/128, 128): full 128-lane unmasked vector stores.
            flat = v1.reshape(total // lane, lane)
        out_flat = pl.pallas_call(
            _copy_kernel,
            out_shape=jax.ShapeDtypeStruct(flat.shape, flat.dtype),
            in_specs=[pl.BlockSpec(memory_space=pltpu.MemorySpace.VMEM)],
            out_specs=pl.BlockSpec(memory_space=pltpu.MemorySpace.VMEM),
            input_output_aliases={0: 0},
            cost_estimate=cost,
        )(flat)
        return out_flat.reshape(orig_shape)

    # Large path: 1-D grid of lane-dense blocks, BlockSpec double-buffering
    # overlaps read and write DMAs; grid axis marked "parallel" so v7x shards
    # the mem-bound copy across its 2 TensorCores.
    lane = _pick_lane(total, (1024, 512, 256, 128))
    if lane is None:
        lane = orig_shape[-1]
        flat = v1.reshape(-1, lane)
    else:
        flat = v1.reshape(total // lane, lane)
    rows = flat.shape[0]
    if rows <= 8:
        br = rows
    else:
        br = min(_BLOCK_ROWS, (rows // 8) * 8)

    out_flat = pl.pallas_call(
        _copy_kernel,
        out_shape=jax.ShapeDtypeStruct(flat.shape, flat.dtype),
        grid=(pl.cdiv(rows, br),),
        in_specs=[pl.BlockSpec((br, lane), lambda i: (i, 0))],
        out_specs=pl.BlockSpec((br, lane), lambda i: (i, 0)),
        input_output_aliases={0: 0},
        cost_estimate=cost,
        compiler_params=pltpu.CompilerParams(
            dimension_semantics=("parallel",),
            vmem_limit_bytes=32 * 1024 * 1024,
        ),
    )(flat)
    return out_flat.reshape(orig_shape)


def model_forward(v1):
    """Mirrors Model.forward:
         split_tensors = torch.split(v1, [1, 1, 1], dim=1)
         concatenated_tensor = torch.cat(split_tensors, dim=1)
         return concatenated_tensor, torch.split(v1, [1, 1, 1], dim=1)
    """
    concatenated = concat_channels(v1)
    # torch.split view semantics: the splits are slices of v1; slicing the
    # aliased concatenated result is numerically identical and keeps a single
    # source buffer (safe even if v1 is donated to the aliased pallas_call),
    # letting XLA fuse/elide the three tiny (N,1,H,W) slice copies.
    split_tensors = (concatenated[:, 0:1], concatenated[:, 1:2], concatenated[:, 2:3])
    return concatenated, split_tensors


# NOTE: __init__ defines Conv2d(1,36,4,2,0), Flatten, Linear(6048,4096), Tanh,
# Linear(4096,4) in a ModuleList, but forward() never calls them.
# TODO(synk): unused `features` ModuleList not materialized (dead code in spec).

if __name__ == "__main__":
    key = jax.random.PRNGKey(0)
    # dim=1 must have size 3 for split([1,1,1], dim=1); small spatial size.
    x = jax.random.normal(key, (2, 3, 16, 16), dtype=jnp.float32)

    concatenated, splits = model_forward(x)
    concatenated = jax.block_until_ready(concatenated)
    splits = tuple(jax.block_until_ready(s) for s in splits)

    # sanity checks against reference semantics
    assert concatenated.shape == x.shape
    assert all(s.shape == (2, 1, 16, 16) for s in splits)
    assert jnp.allclose(concatenated, x)
    assert jnp.allclose(splits[0], x[:, 0:1])
    assert jnp.allclose(splits[1], x[:, 1:2])
    assert jnp.allclose(splits[2], x[:, 2:3])

    print("KERNEL_OK")
</pallas_src>

<mosaic_0001>
module attributes {stable_mosaic.version = 11 : i64} {
  func.func @_copy_kernel(%arg0: memref<12x128xf32, #tpu.memory_space<vmem>>, %arg1: memref<12x128xf32, #tpu.memory_space<vmem>>) attributes {dimension_semantics = [], scalar_prefetch = 0 : i64, scratch_operands = 0 : i64, tpu.core_type = #tpu.core_type<tc>} {
    %c0 = arith.constant 0 : index
    %c0_0 = arith.constant 0 : index
    %0 = vector.load %arg0[%c0, %c0_0] : memref<12x128xf32, #tpu.memory_space<vmem>>, vector<12x128xf32>
    %c0_1 = arith.constant 0 : index
    %c0_2 = arith.constant 0 : index
    %1 = vector.load %arg1[%c0_1, %c0_2] : memref<12x128xf32, #tpu.memory_space<vmem>>, vector<12x128xf32>
    tpu.vector_store %arg1[%c0_1, %c0_2], %0 {strides = array<i32>} : memref<12x128xf32, #tpu.memory_space<vmem>>, vector<12x128xf32>,
    return
  }
}

</mosaic_0001>

<llo_original>
// kernel: tpu_custom_call.1
$region0: #{tpu_custom_call.1}
  #allocation0 [shape = 'u32[]', space=smem, size = 0x4, offset = 0x4, fixed_abs, tag = 'smem constant byte address 0x4 - core index']
  #allocation1 [shape = 'u32[72,128]{1,0:T(1,128)}', space=vmem, size = 0x9000, scoped, tag = 'internal scratch']
  %s0 = inlined_call_operand.hbm [shape: f32[12,128], index: 0, kind: input, shape index: {}, may-alias: {0,1}]
  %s1 = inlined_call_operand.hbm [shape: f32[12,128], index: 1, kind: output, shape index: {}, may-alias: {0,1}]
  %s2 = sld [smem:[#allocation0]]
  $region18: #{tpu_custom_call.1} parent=0
    _
  %s4 = ssub.s32 1, %s2
  %s5 = scalar_select 0, %s4, %s2
  $region1: #{tpu_custom_call.1} parent=0
    #allocation2 [shape = 'u8[8192]{0}', space=vmem, size = 0x2000, scoped, tag = 'input window, operand 0, single buffered']
    #allocation3 [shape = 's32[1]{0}', space=sflag, size = 0x4, scoped, tag = 'scoped memory for tpu_custom_call.1']
    #allocation4 [shape = 's32[1]{0}', space=sflag, size = 0x4, scoped, tag = 'scoped memory for tpu_custom_call.1']
    #allocation5 [shape = 'u8[8192]{0}', space=vmem, size = 0x2000, scoped, tag = 'output window, operand 0, single buffered']
    %6 = vsyncpa [#allocation3], 0
    %7 = vsyncpa [#allocation4], 0
    // Predicated region
    $region2: #{tpu_custom_call.1} parent=1 // pred_check
      _
    $region3: #{tpu_custom_call.1} parent=1 // pred_check_branch
      %9 = sbr.rel (0) target = $region5
    $region4: #{tpu_custom_call.1} parent=1 // pred_region
      %11 = vsyncadd [#allocation3], 0
      %s12 = sshll.u32 %s0, 4
      %s13 = int_to_ptr.hbm [resolvable:$true] %s12
      %s14 = sshll.u32 [#allocation2], 4
      %s15 = int_to_ptr.vmem [resolvable:$true] %s14
      %20 = dma.hbm_to_vmem [thread:$0]  %s13, 256, %s15, [#allocation3], 128, 128, 8
    $region5: #{tpu_custom_call.1} parent=1 // pred_fallthru
      _
    // Predicated region
    $region6: #{tpu_custom_call.1} parent=1 // pred_check
      _
    $region7: #{tpu_custom_call.1} parent=1 // pred_check_branch
      %22 = sbr.rel (0) target = $region9
    $region8: #{tpu_custom_call.1} parent=1 // pred_region
      %24 = dma.done [#allocation3], 256
    $region9: #{tpu_custom_call.1} parent=1 // pred_fallthru
      _
    %v25 = vld [vmem:[#allocation2] sm:$0xff]
    %v26 = vld [vmem:[#allocation2 + $0x8] sm:$0xf]
    %27 = vst [vmem:[#allocation5] sm:$0xff] %v25
    %28 = vst [vmem:[#allocation5 + $0x8] sm:$0xf] %v26
    // Predicated region
    $region10: #{tpu_custom_call.1} parent=1 // pred_check
      _
    $region11: #{tpu_custom_call.1} parent=1 // pred_check_branch
      %30 = sbr.rel (0) target = $region13
    $region12: #{tpu_custom_call.1} parent=1 // pred_region
      %32 = vsyncadd [#allocation4], 0
      %s33 = sshll.u32 [#allocation5], 4
      %s34 = int_to_ptr.vmem [resolvable:$true] %s33
      %s35 = sshll.u32 %s1, 4
      %s36 = int_to_ptr.hbm [resolvable:$true] %s35
      %41 = dma.vmem_to_hbm [thread:$0]  %s34, 256, %s36, [#allocation4], 128, 128, 8
    $region13: #{tpu_custom_call.1} parent=1 // pred_fallthru
      _
    // Predicated region
    $region14: #{tpu_custom_call.1} parent=1 // pred_check
      _
    $region15: #{tpu_custom_call.1} parent=1 // pred_check_branch
      %43 = sbr.rel (0) target = $region17
    $region16: #{tpu_custom_call.1} parent=1 // pred_region
      %45 = dma.done [#allocation4], 256
    $region17: #{tpu_custom_call.1} parent=1 // pred_fallthru
      _
    %46 = vsyncpa [#allocation3], 1
    %47 = vsyncpa [#allocation4], 1

</llo_original>
